<compile_context>
chip_gen: v7x
topology: tpu7x:2x2x1
jax: 0.10.0
libtpu: 0.0.40
codegen_flags: <defaults>
</compile_context>

<pallas_src>
import functools

import jax
import jax.numpy as jnp
from jax import lax
from jax.experimental import pallas as pl
from jax.experimental.pallas import tpu as pltpu


def _round_up(x, m):
    return ((x + m - 1) // m) * m


# ----------------------------------------------------------------------------
# Kernel
# ----------------------------------------------------------------------------
def azero_fc_kernel(x_ref,
                    wc_ref, bc_ref,
                    wpv_ref, bpv_ref,
                    wpol_ref, bpol_ref,
                    wval_ref, bval_ref,
                    out_ref, *, out_dim, hidden):
    # common trunk: relu(x @ Wc + bc).  x already in the weight dtype; f32 acc.
    h = jnp.dot(x_ref[...], wc_ref[...],
                preferred_element_type=jnp.float32) + bc_ref[...]
    h = jnp.maximum(h, 0.0)

    # fused policy/value hidden layer: one (H, 2H) matmul instead of two (H, H).
    wpv = wpv_ref[...]
    h_pv = jnp.dot(h.astype(wpv.dtype), wpv,
                   preferred_element_type=jnp.float32) + bpv_ref[...]
    h_pv = jnp.maximum(h_pv, 0.0)          # [h_p | h_v], lane-aligned halves

    h_p = h_pv[:, :hidden]
    h_v = h_pv[:, hidden:]

    # policy head: K=H matmul into a zero-padded, lane-dense P-wide slab.
    wpol = wpol_ref[...]
    z = jnp.dot(h_p.astype(wpol.dtype), wpol,
                preferred_element_type=jnp.float32) + bpol_ref[...]

    col = lax.broadcasted_iota(jnp.int32, z.shape, 1)
    is_policy = col < out_dim
    logits = jnp.where(is_policy, z, jnp.float32(-1e30))   # mask pad columns
    m = jnp.max(logits, axis=-1, keepdims=True)
    e = jnp.exp(logits - m)                                 # 0 on masked cols
    s = jnp.sum(e, axis=-1, keepdims=True)
    probs = e / s                                           # exact (tile,1) div

    # value head: VPU multiply + lane reduction (f32 throughout, no MXU work).
    val = jnp.sum(h_v * wval_ref[...], axis=-1, keepdims=True) + bval_ref[...]

    # slab layout: cols [0, out_dim) = policy probs, col out_dim = raw value,
    # cols > out_dim = zero padding (dead payload kept for lane-dense stores).
    out_ref[...] = jnp.where(col == out_dim, val, probs).astype(out_ref.dtype)


# ----------------------------------------------------------------------------
# Parameter fusion / packing
# ----------------------------------------------------------------------------
def fuse_params(params, param_dtype=jnp.float32):
    """Pack the five nn.Linear layers for the fused kernel.

    MXU weights (wc, wpv, wpol) may be cast to `param_dtype` (bf16 is native on
    v5e/v6e/v7x MXUs).  Biases and the value-head row stay float32 (VPU path).
    """
    H = params["wc"].shape[1]
    out_dim = params["wpol"].shape[1]
    P = _round_up(out_dim + 1, 128)

    wpv = jnp.concatenate([params["wp"], params["wv"]], axis=1)       # (H, 2H)
    bpv = jnp.concatenate([params["bp"], params["bv"]], axis=1)       # (1, 2H)

    wpol = jnp.zeros((H, P), jnp.float32).at[:, :out_dim].set(params["wpol"])
    bpol = jnp.zeros((1, P), jnp.float32).at[:, :out_dim].set(params["bpol"][0])

    return dict(
        wc=params["wc"].astype(param_dtype),
        bc=params["bc"].astype(jnp.float32),
        wpv=wpv.astype(param_dtype),
        bpv=bpv.astype(jnp.float32),
        wpol=wpol.astype(param_dtype),
        bpol=bpol,
        wval=params["wval"].T.astype(jnp.float32),   # (1, H) row, VPU value path
        bval=params["bval"].astype(jnp.float32),     # (1, 1)
        out_dim=out_dim,
        padded_dim=P,
    )


# ----------------------------------------------------------------------------
# Wrapper
# ----------------------------------------------------------------------------
def _pick_batch_tile(B):
    """Single grid step for small batches; 256-row-multiple tiles (capped ~1K,
    >=2 steps for v7x megacore sharding, padding <= one tile) for large ones."""
    if B <= 1024:
        return max(8, _round_up(B, 8))
    n_tiles = max(2, pl.cdiv(B, 1024))
    return _round_up(pl.cdiv(B, n_tiles), 256)


def azero_brain_forward(x, fused, *, batch_tile=None, out_dtype=jnp.float32):
    """x: (B, input_dim) float32. fused: output of fuse_params()."""
    B, D = x.shape
    H = fused["wc"].shape[1]
    P = fused["padded_dim"]
    out_dim = fused["out_dim"]

    if batch_tile is None:
        batch_tile = _pick_batch_tile(B)
    batch_tile = max(8, _round_up(batch_tile, 8))
    Bp = _round_up(B, batch_tile)

    # Pre-cast x to the weight dtype (halves x DMA in bf16 mode) and pad batch.
    xp = x.astype(fused["wc"].dtype)
    if Bp != B:
        xp = jnp.pad(xp, ((0, Bp - B), (0, 0)))

    weights = (fused["wc"], fused["bc"],
               fused["wpv"], fused["bpv"],
               fused["wpol"], fused["bpol"],
               fused["wval"], fused["bval"])

    wbytes = sum(int(w.size) * w.dtype.itemsize for w in weights)
    cost = pl.CostEstimate(
        flops=2 * Bp * (D * H + H * 2 * H + H * P + H),
        transcendentals=Bp * P,
        bytes_accessed=int(xp.size) * xp.dtype.itemsize + wbytes
                       + Bp * P * jnp.dtype(out_dtype).itemsize,
    )

    kernel = functools.partial(azero_fc_kernel, out_dim=out_dim, hidden=H)

    def const_spec(arr):
        nd = arr.ndim
        return pl.BlockSpec(arr.shape, lambda i, _nd=nd: (0,) * _nd)

    in_specs = [pl.BlockSpec((batch_tile, D), lambda i: (i, 0))]
    in_specs += [const_spec(w) for w in weights]

    out = pl.pallas_call(
        kernel,
        out_shape=jax.ShapeDtypeStruct((Bp, P), out_dtype),
        grid=(Bp // batch_tile,),
        in_specs=in_specs,
        out_specs=pl.BlockSpec((batch_tile, P), lambda i: (i, 0)),
        compiler_params=pltpu.CompilerParams(
            dimension_semantics=("parallel",)),
        cost_estimate=cost,
    )(xp, *weights)

    policy = out[:B, :out_dim]
    value = out[:B, out_dim:out_dim + 1]
    return policy, value


# ----------------------------------------------------------------------------
# Reference / init (deterministic, self-contained)
# ----------------------------------------------------------------------------
def init_params(key, input_dim, num_hidden, output_dim):
    """Deterministic synthetic init. Weights stored as (in, out); biases (1, out)."""
    ks = jax.random.split(key, 10)

    def lin(kw, kb, fan_in, fan_out):
        bound = 1.0 / jnp.sqrt(fan_in)
        w = jax.random.uniform(kw, (fan_in, fan_out), jnp.float32, -bound, bound)
        b = jax.random.uniform(kb, (1, fan_out), jnp.float32, -bound, bound)
        return w, b

    wc, bc = lin(ks[0], ks[1], input_dim, num_hidden)       # _fc0
    wp, bp = lin(ks[2], ks[3], num_hidden, num_hidden)      # _fc_policy0
    wv, bv = lin(ks[4], ks[5], num_hidden, num_hidden)      # _fc_value0
    wpol, bpol = lin(ks[6], ks[7], num_hidden, output_dim)  # self.policy
    wval, bval = lin(ks[8], ks[9], num_hidden, 1)           # self.value
    return dict(wc=wc, bc=bc, wp=wp, bp=bp, wv=wv, bv=bv,
                wpol=wpol, bpol=bpol, wval=wval, bval=bval)


def reference_forward(x, p):
    relu = lambda z: jnp.maximum(z, 0.0)
    h = relu(x @ p["wc"] + p["bc"])
    h_p = relu(h @ p["wp"] + p["bp"])
    h_v = relu(h @ p["wv"] + p["bv"])
    policy = jax.nn.softmax(h_p @ p["wpol"] + p["bpol"], axis=-1)
    value = h_v @ p["wval"] + p["bval"]
    return policy, value


if __name__ == "__main__":
    # Small shapes consistent with the FC module: flat observations.
    batch = 64
    input_dim = 32       # self.input_dim = (32,)
    output_dim = 8       # self.output_dim
    num_hidden = 256     # AzeroBrain default num_hidden

    key = jax.random.PRNGKey(0)
    k_x, k_p = jax.random.split(key)
    x = jax.random.normal(k_x, (batch, input_dim), jnp.float32)
    params = init_params(k_p, input_dim, num_hidden, output_dim)

    ref_policy, ref_value = reference_forward(x, params)

    # f32 run; small batch -> single grid step (no per-step pipeline overhead).
    fused = fuse_params(params, jnp.float32)
    policy, value = azero_brain_forward(x, fused)
    policy, value = jax.block_until_ready((policy, value))
    assert policy.shape == (batch, output_dim)
    assert value.shape == (batch, 1)
    assert jnp.allclose(policy, ref_policy, atol=1e-5, rtol=1e-5)
    assert jnp.allclose(value, ref_value, atol=1e-5, rtol=1e-5)
    assert jnp.allclose(jnp.sum(policy, axis=-1), 1.0, atol=1e-5)

    # Tiled-path sanity check (2 grid steps) — exercises padding + pipelining.
    policy_t, value_t = azero_brain_forward(x, fused, batch_tile=32)
    policy_t, value_t = jax.block_until_ready((policy_t, value_t))
    assert jnp.allclose(policy_t, ref_policy, atol=1e-5, rtol=1e-5)
    assert jnp.allclose(value_t, ref_value, atol=1e-5, rtol=1e-5)

    # bf16 MXU weights (native on v5e/v6e/v7x); elementwise math stays f32.
    fused_bf16 = fuse_params(params, jnp.bfloat16)
    policy_bf, value_bf = azero_brain_forward(x, fused_bf16)
    policy_bf, value_bf = jax.block_until_ready((policy_bf, value_bf))
    assert bool(jnp.all(jnp.isfinite(policy_bf)))
    assert bool(jnp.all(jnp.isfinite(value_bf)))
    assert jnp.allclose(jnp.sum(policy_bf, axis=-1), 1.0, atol=5e-3)
    assert jnp.allclose(policy_bf, policy, atol=0.1)
    assert jnp.allclose(value_bf, value, atol=0.1)

    print("KERNEL_OK")
</pallas_src>

<mosaic_0001>
module attributes {stable_mosaic.version = 11 : i64} {
  func.func @azero_fc_kernel(%arg0: i32, %arg1: memref<64x32xf32, #tpu.memory_space<vmem>>, %arg2: memref<32x256xf32, #tpu.memory_space<vmem>>, %arg3: memref<1x256xf32, #tpu.memory_space<vmem>>, %arg4: memref<256x512xf32, #tpu.memory_space<vmem>>, %arg5: memref<1x512xf32, #tpu.memory_space<vmem>>, %arg6: memref<256x128xf32, #tpu.memory_space<vmem>>, %arg7: memref<1x128xf32, #tpu.memory_space<vmem>>, %arg8: memref<1x256xf32, #tpu.memory_space<vmem>>, %arg9: memref<1x1xf32, #tpu.memory_space<vmem>>, %arg10: memref<64x128xf32, #tpu.memory_space<vmem>>) attributes {dimension_semantics = [#tpu.dimension_semantics<parallel>], iteration_bounds = array<i64: 1>, scalar_prefetch = 0 : i64, scratch_operands = 0 : i64, tpu.core_type = #tpu.core_type<tc>, window_params = [{transform_indices = @transform_0, window_bounds = array<i64: 64, 32>}, {pipeline_mode = #tpu.pipeline_mode<synchronous>, transform_indices = @transform_1, window_bounds = array<i64: 32, 256>}, {pipeline_mode = #tpu.pipeline_mode<synchronous>, transform_indices = @transform_2, window_bounds = array<i64: 1, 256>}, {pipeline_mode = #tpu.pipeline_mode<synchronous>, transform_indices = @transform_3, window_bounds = array<i64: 256, 512>}, {pipeline_mode = #tpu.pipeline_mode<synchronous>, transform_indices = @transform_4, window_bounds = array<i64: 1, 512>}, {pipeline_mode = #tpu.pipeline_mode<synchronous>, transform_indices = @transform_5, window_bounds = array<i64: 256, 128>}, {pipeline_mode = #tpu.pipeline_mode<synchronous>, transform_indices = @transform_6, window_bounds = array<i64: 1, 128>}, {pipeline_mode = #tpu.pipeline_mode<synchronous>, transform_indices = @transform_7, window_bounds = array<i64: 1, 256>}, {pipeline_mode = #tpu.pipeline_mode<synchronous>, transform_indices = @transform_8, window_bounds = array<i64: 1, 1>}, {transform_indices = @transform_9, window_bounds = array<i64: 64, 128>}]} {
    %c0 = arith.constant 0 : index
    %c0_0 = arith.constant 0 : index
    %0 = vector.load %arg1[%c0, %c0_0] : memref<64x32xf32, #tpu.memory_space<vmem>>, vector<64x32xf32>
    %c0_1 = arith.constant 0 : index
    %c0_2 = arith.constant 0 : index
    %1 = vector.load %arg2[%c0_1, %c0_2] : memref<32x256xf32, #tpu.memory_space<vmem>>, vector<32x256xf32>
    %cst = arith.constant dense<0.000000e+00> : vector<64x256xf32>
    %2 = tpu.matmul %0, %1, %cst {dimension_numbers = #tpu.dot_dimension_numbers<[1], [0], [0], [1], [0, 0, 1, 1], [], []>} : vector<64x32xf32>, vector<32x256xf32>, vector<64x256xf32> -> vector<64x256xf32>
    %c0_3 = arith.constant 0 : index
    %c0_4 = arith.constant 0 : index
    %3 = vector.load %arg3[%c0_3, %c0_4] : memref<1x256xf32, #tpu.memory_space<vmem>>, vector<1x256xf32>
    %4 = vector.broadcast %3 : vector<1x256xf32> to vector<64x256xf32>
    %5 = arith.addf %2, %4 : vector<64x256xf32>
    %cst_5 = arith.constant 0.000000e+00 : f32
    %6 = vector.broadcast %cst_5 : f32 to vector<64x256xf32>
    %7 = arith.maximumf %5, %6 : vector<64x256xf32>
    %c0_6 = arith.constant 0 : index
    %c0_7 = arith.constant 0 : index
    %8 = vector.load %arg4[%c0_6, %c0_7] : memref<256x512xf32, #tpu.memory_space<vmem>>, vector<256x512xf32>
    %cst_8 = arith.constant dense<0.000000e+00> : vector<64x512xf32>
    %9 = tpu.matmul %7, %8, %cst_8 {dimension_numbers = #tpu.dot_dimension_numbers<[1], [0], [0], [1], [0, 0, 1, 1], [], []>} : vector<64x256xf32>, vector<256x512xf32>, vector<64x512xf32> -> vector<64x512xf32>
    %c0_9 = arith.constant 0 : index
    %c0_10 = arith.constant 0 : index
    %10 = vector.load %arg5[%c0_9, %c0_10] : memref<1x512xf32, #tpu.memory_space<vmem>>, vector<1x512xf32>
    %11 = vector.broadcast %10 : vector<1x512xf32> to vector<64x512xf32>
    %12 = arith.addf %9, %11 : vector<64x512xf32>
    %cst_11 = arith.constant 0.000000e+00 : f32
    %13 = vector.broadcast %cst_11 : f32 to vector<64x512xf32>
    %14 = arith.maximumf %12, %13 : vector<64x512xf32>
    %15 = vector.extract_strided_slice %14 {offsets = [0, 0], sizes = [64, 256], strides = [1, 1]} : vector<64x512xf32> to vector<64x256xf32>
    %16 = vector.extract_strided_slice %14 {offsets = [0, 256], sizes = [64, 256], strides = [1, 1]} : vector<64x512xf32> to vector<64x256xf32>
    %c0_12 = arith.constant 0 : index
    %c0_13 = arith.constant 0 : index
    %17 = vector.load %arg6[%c0_12, %c0_13] : memref<256x128xf32, #tpu.memory_space<vmem>>, vector<256x128xf32>
    %cst_14 = arith.constant dense<0.000000e+00> : vector<64x128xf32>
    %18 = tpu.matmul %15, %17, %cst_14 {dimension_numbers = #tpu.dot_dimension_numbers<[1], [0], [0], [1], [0, 0, 1, 1], [], []>} : vector<64x256xf32>, vector<256x128xf32>, vector<64x128xf32> -> vector<64x128xf32>
    %c0_15 = arith.constant 0 : index
    %c0_16 = arith.constant 0 : index
    %19 = vector.load %arg7[%c0_15, %c0_16] : memref<1x128xf32, #tpu.memory_space<vmem>>, vector<1x128xf32>
    %20 = vector.broadcast %19 : vector<1x128xf32> to vector<64x128xf32>
    %21 = arith.addf %18, %20 : vector<64x128xf32>
    %22 = tpu.iota {dimensions = array<i32: 1>} : vector<64x128xi32>
    %c8_i32 = arith.constant 8 : i32
    %23 = vector.broadcast %c8_i32 : i32 to vector<64x128xi32>
    %24 = arith.cmpi slt, %22, %23 : vector<64x128xi32>
    %cst_17 = arith.constant -1.000000e+30 : f32
    %25 = vector.broadcast %cst_17 : f32 to vector<64x128xf32>
    %26 = arith.select %24, %21, %25 : vector<64x128xi1>, vector<64x128xf32>
    %cst_18 = arith.constant dense<0xFF800000> : vector<64xf32>
    %27 = vector.multi_reduction <maximumf>, %26, %cst_18 [1] : vector<64x128xf32> to vector<64xf32>
    %28 = vector.shape_cast %27 : vector<64xf32> to vector<64x1xf32>
    %29 = vector.broadcast %28 : vector<64x1xf32> to vector<64x128xf32>
    %30 = arith.subf %26, %29 : vector<64x128xf32>
    %31 = math.exp %30 : vector<64x128xf32>
    %cst_19 = arith.constant dense<0.000000e+00> : vector<64xf32>
    %32 = vector.multi_reduction <add>, %31, %cst_19 [1] : vector<64x128xf32> to vector<64xf32>
    %33 = vector.shape_cast %32 : vector<64xf32> to vector<64x1xf32>
    %34 = vector.broadcast %33 : vector<64x1xf32> to vector<64x128xf32>
    %35 = arith.divf %31, %34 : vector<64x128xf32>
    %c0_20 = arith.constant 0 : index
    %c0_21 = arith.constant 0 : index
    %36 = vector.load %arg8[%c0_20, %c0_21] : memref<1x256xf32, #tpu.memory_space<vmem>>, vector<1x256xf32>
    %37 = vector.broadcast %36 : vector<1x256xf32> to vector<64x256xf32>
    %38 = arith.mulf %16, %37 : vector<64x256xf32>
    %cst_22 = arith.constant dense<0.000000e+00> : vector<64xf32>
    %39 = vector.multi_reduction <add>, %38, %cst_22 [1] : vector<64x256xf32> to vector<64xf32>
    %40 = vector.shape_cast %39 : vector<64xf32> to vector<64x1xf32>
    %c0_23 = arith.constant 0 : index
    %c0_24 = arith.constant 0 : index
    %41 = vector.load %arg9[%c0_23, %c0_24] : memref<1x1xf32, #tpu.memory_space<vmem>>, vector<1x1xf32>
    %42 = vector.broadcast %41 : vector<1x1xf32> to vector<64x1xf32>
    %43 = arith.addf %40, %42 : vector<64x1xf32>
    %c8_i32_25 = arith.constant 8 : i32
    %44 = vector.broadcast %c8_i32_25 : i32 to vector<64x128xi32>
    %45 = arith.cmpi eq, %22, %44 : vector<64x128xi32>
    %46 = vector.shape_cast %43 : vector<64x1xf32> to vector<64x1xf32>
    %47 = vector.broadcast %46 : vector<64x1xf32> to vector<64x128xf32>
    %48 = arith.select %45, %47, %35 : vector<64x128xi1>, vector<64x128xf32>
    %c0_26 = arith.constant 0 : index
    %c0_27 = arith.constant 0 : index
    %49 = vector.load %arg10[%c0_26, %c0_27] : memref<64x128xf32, #tpu.memory_space<vmem>>, vector<64x128xf32>
    tpu.vector_store %arg10[%c0_26, %c0_27], %48 {strides = array<i32>} : memref<64x128xf32, #tpu.memory_space<vmem>>, vector<64x128xf32>,
    return
  }
  func.func @transform_0(%arg0: i32) -> (i32, i32) {
    %c0_i32 = arith.constant 0 : i32
    %c0_i32_0 = arith.constant 0 : i32
    return %arg0, %c0_i32 : i32, i32
  }
  func.func @transform_1(%arg0: i32) -> (i32, i32) {
    %c0_i32 = arith.constant 0 : i32
    %c0_i32_0 = arith.constant 0 : i32
    %c0_i32_1 = arith.constant 0 : i32
    return %c0_i32, %c0_i32_0 : i32, i32
  }
  func.func @transform_2(%arg0: i32) -> (i32, i32) {
    %c0_i32 = arith.constant 0 : i32
    %c0_i32_0 = arith.constant 0 : i32
    %c0_i32_1 = arith.constant 0 : i32
    return %c0_i32, %c0_i32_0 : i32, i32
  }
  func.func @transform_3(%arg0: i32) -> (i32, i32) {
    %c0_i32 = arith.constant 0 : i32
    %c0_i32_0 = arith.constant 0 : i32
    %c0_i32_1 = arith.constant 0 : i32
    return %c0_i32, %c0_i32_0 : i32, i32
  }
  func.func @transform_4(%arg0: i32) -> (i32, i32) {
    %c0_i32 = arith.constant 0 : i32
    %c0_i32_0 = arith.constant 0 : i32
    %c0_i32_1 = arith.constant 0 : i32
    return %c0_i32, %c0_i32_0 : i32, i32
  }
  func.func @transform_5(%arg0: i32) -> (i32, i32) {
    %c0_i32 = arith.constant 0 : i32
    %c0_i32_0 = arith.constant 0 : i32
    %c0_i32_1 = arith.constant 0 : i32
    return %c0_i32, %c0_i32_0 : i32, i32
  }
  func.func @transform_6(%arg0: i32) -> (i32, i32) {
    %c0_i32 = arith.constant 0 : i32
    %c0_i32_0 = arith.constant 0 : i32
    %c0_i32_1 = arith.constant 0 : i32
    return %c0_i32, %c0_i32_0 : i32, i32
  }
  func.func @transform_7(%arg0: i32) -> (i32, i32) {
    %c0_i32 = arith.constant 0 : i32
    %c0_i32_0 = arith.constant 0 : i32
    %c0_i32_1 = arith.constant 0 : i32
    return %c0_i32, %c0_i32_0 : i32, i32
  }
  func.func @transform_8(%arg0: i32) -> (i32, i32) {
    %c0_i32 = arith.constant 0 : i32
    %c0_i32_0 = arith.constant 0 : i32
    %c0_i32_1 = arith.constant 0 : i32
    return %c0_i32, %c0_i32_0 : i32, i32
  }
  func.func @transform_9(%arg0: i32) -> (i32, i32) {
    %c0_i32 = arith.constant 0 : i32
    %c0_i32_0 = arith.constant 0 : i32
    return %arg0, %c0_i32 : i32, i32
  }
}

</mosaic_0001>

<llo_original>
// kernel: tpu_custom_call.1
$region0: #{tpu_custom_call.1}
  #allocation0 [shape = 'u32[]', space=smem, size = 0x4, offset = 0x4, fixed_abs, tag = 'smem constant byte address 0x4 - core index']
  #allocation1 [shape = 'u32[144,128]{1,0:T(1,128)}', space=vmem, size = 0x12000, scoped, tag = 'internal scratch']
  #allocation2 [shape = 'f32[1,1]{1,0:T(1,128)S(1)}', space=vmem, size = 0x200, scoped, tag = 'scoped memory for tpu_custom_call.1']
  %s0 = inlined_call_operand.vmem [shape: f32[64,32], index: 0, kind: input, shape index: {}]
  %s1 = inlined_call_operand.vmem [shape: f32[32,256], index: 1, kind: input, shape index: {}]
  %s2 = inlined_call_operand.vmem [shape: f32[1,256], index: 2, kind: input, shape index: {}]
  %s3 = inlined_call_operand.hbm [shape: f32[256,512], index: 3, kind: input, shape index: {}]
  %s4 = inlined_call_operand.vmem [shape: f32[1,512], index: 4, kind: input, shape index: {}]
  %s5 = inlined_call_operand.hbm [shape: f32[256,128], index: 5, kind: input, shape index: {}]
  %s6 = inlined_call_operand.vmem [shape: f32[1,128], index: 6, kind: input, shape index: {}]
  %s7 = inlined_call_operand.vmem [shape: f32[1,256], index: 7, kind: input, shape index: {}]
  %s8 = inlined_call_operand.<no memory space> [shape: f32[1,1], index: 8, kind: input, shape index: {}]
  %s9 = inlined_call_operand.hbm [shape: f32[64,128], index: 9, kind: output, shape index: {}]
  %s10 = sld [smem:[#allocation0]]
  $region54: #{tpu_custom_call.1} parent=0
    _
  %s12 = ssub.s32 1, %s10
  %s13 = scalar_select 0, %s12, %s10
  %v14 = vstv %s8
  %15 = vst [vmem:[#allocation2] sm:$0x1] %v14
  $region1: #{tpu_custom_call.1} parent=0
    #allocation3 [shape = 'u8[524288]{0}', space=vmem, size = 0x80000, scoped, tag = 'input window, operand 3, single buffered']
    #allocation4 [shape = 's32[1]{0}', space=sflag, size = 0x4, scoped, tag = 'scoped memory for tpu_custom_call.1']
    #allocation5 [shape = 's32[1]{0}', space=sflag, size = 0x4, scoped, tag = 'scoped memory for tpu_custom_call.1']
    #allocation6 [shape = 'u8[131072]{0}', space=vmem, size = 0x20000, scoped, tag = 'input window, operand 5, single buffered']
    #allocation7 [shape = 's32[1]{0}', space=sflag, size = 0x4, scoped, tag = 'scoped memory for tpu_custom_call.1']
    #allocation8 [shape = 'u8[32768]{0}', space=vmem, size = 0x8000, scoped, tag = 'output window, operand 0, single buffered']
    %16 = vsyncpa [#allocation4], 0
    %17 = vsyncpa [#allocation7], 0
    %18 = vsyncpa [#allocation5], 0
    // Predicated region
    $region2: #{tpu_custom_call.1} parent=1 // pred_check
      _
    $region3: #{tpu_custom_call.1} parent=1 // pred_check_branch
      %20 = sbr.rel (0) target = $region5
    $region4: #{tpu_custom_call.1} parent=1 // pred_region
      _
    $region5: #{tpu_custom_call.1} parent=1 // pred_fallthru
      _
    // Predicated region
    $region6: #{tpu_custom_call.1} parent=1 // pred_check
      _
    $region7: #{tpu_custom_call.1} parent=1 // pred_check_branch
      %22 = sbr.rel (0) target = $region9
    $region8: #{tpu_custom_call.1} parent=1 // pred_region
      _
    $region9: #{tpu_custom_call.1} parent=1 // pred_fallthru
      _
    // Predicated region
    $region10: #{tpu_custom_call.1} parent=1 // pred_check
      _
    $region11: #{tpu_custom_call.1} parent=1 // pred_check_branch
      %24 = sbr.rel (0) target = $region13
    $region12: #{tpu_custom_call.1} parent=1 // pred_region
      _
    $region13: #{tpu_custom_call.1} parent=1 // pred_fallthru
      _
    // Predicated region
    $region14: #{tpu_custom_call.1} parent=1 // pred_check
      _
    $region15: #{tpu_custom_call.1} parent=1 // pred_check_branch
      %26 = sbr.rel (0) target = $region17
    $region16: #{tpu_custom_call.1} parent=1 // pred_region
      %s28 = ssub.s32 16384, 16384
      %29 = vsyncadd [#allocation4], %s28
      %s30 = sshll.u32 [#allocation3], 4
      %s31 = int_to_ptr.vmem [resolvable:$true] %s30
      %36 = dma.hbm_to_vmem [thread:$0]  %s3, 16384, %s31, [#allocation4], 512, 512, 32
    $region17: #{tpu_custom_call.1} parent=1 // pred_fallthru
      _
    // Predicated region
    $region18: #{tpu_custom_call.1} parent=1 // pred_check
      _
    $region19: #{tpu_custom_call.1} parent=1 // pred_check_branch
      %38 = sbr.rel (0) target = $region21
    $region20: #{tpu_custom_call.1} parent=1 // pred_region
      _
    $region21: #{tpu_custom_call.1} parent=1 // pred_fallthru
      _
    // Predicated region
    $region22: #{tpu_custom_call.1} parent=1 // pred_check
      _
    $region23: #{tpu_custom_call.1} parent=1 // pred_check_branch
      %40 = sbr.rel (0) target = $region25
    $region24: #{tpu_custom_call.1} parent=1 // pred_region
      %s42 = ssub.s32 4096, 4096
      %43 = vsyncadd [#allocation7], %s42
      %s44 = sshll.u32 [#allocation6], 4
      %s45 = int_to_ptr.vmem [resolvable:$true] %s44
      %50 = dma.hbm_to_vmem [thread:$0]  %s5, 4096, %s45, [#allocation7], 128, 128, 8
    $region25: #{tpu_custom_call.1} parent=1 // pred_fallthru
      _
    // Predicated region
    $region26: #{tpu_custom_call.1} parent=1 // pred_check
      _
    $region27: #{tpu_custom_call.1} parent=1 // pred_check_branch
      %52 = sbr.rel (0) target = $region29
    $region28: #{tpu_custom_call.1} parent=1 // pred_region
      _
    $region29: #{tpu_custom_call.1} parent=1 // pred_fallthru
      _
    // Predicated region
    $region30: #{tpu_custom_call.1} parent=1 // pred_check
      _
    $region31: #{tpu_custom_call.1} parent=1 // pred_check_branch
      %54 = sbr.rel (0) target = $region33
    $region32: #{tpu_custom_call.1} parent=1 // pred_region
      _
    $region33: #{tpu_custom_call.1} parent=1 // pred_fallthru
      _
    // Predicated region
    $region34: #{tpu_custom_call.1} parent=1 // pred_check
      _
    $region35: #{tpu_custom_call.1} parent=1 // pred_check_branch
      %56 = sbr.rel (0) target = $region37
    $region36: #{tpu_custom_call.1} parent=1 // pred_region
      _
    $region37: #{tpu_custom_call.1} parent=1 // pred_fallthru
      _
    // Predicated region
    $region38: #{tpu_custom_call.1} parent=1 // pred_check
      _
    $region39: #{tpu_custom_call.1} parent=1 // pred_check_branch
      %58 = sbr.rel (0) target = $region41
    $region40: #{tpu_custom_call.1} parent=1 // pred_region
      %59 = dma.done [#allocation4], 16384
    $region41: #{tpu_custom_call.1} parent=1 // pred_fallthru
      _
    // Predicated region
    $region42: #{tpu_custom_call.1} parent=1 // pred_check
      _
    $region43: #{tpu_custom_call.1} parent=1 // pred_check_branch
      %61 = sbr.rel (0) target = $region45
    $region44: #{tpu_custom_call.1} parent=1 // pred_region
      %62 = dma.done [#allocation7], 4096
    $region45: #{tpu_custom_call.1} parent=1 // pred_fallthru
      _
    %v63 = vld [vmem:[%s0] sm:$0xff]
    %v64 = vld [vmem:[%s0 + $0x8] sm:$0xff]
    %v65 = vld [vmem:[%s0 + $0x10] sm:$0xff]
    %v66 = vld [vmem:[%s0 + $0x18] sm:$0xff]
    %v67 = vld [vmem:[%s0 + $0x20] sm:$0xff]
    %v68 = vld [vmem:[%s0 + $0x28] sm:$0xff]
    %v69 = vld [vmem:[%s0 + $0x30] sm:$0xff]
    %v70 = vld [vmem:[%s0 + $0x38] sm:$0xff]
    %v71 = vld [vmem:[%s1] sm:$0xff]
    %v72 = vld [vmem:[%s1 + $0x8] sm:$0xff]
    %v73 = vld [vmem:[%s1 + $0x10] sm:$0xff]
    %v74 = vld [vmem:[%s1 + $0x18] sm:$0xff]
    %v75 = vld [vmem:[%s1 + $0x20] sm:$0xff]
    %v76 = vld [vmem:[%s1 + $0x28] sm:$0xff]
    %v77 = vld [vmem:[%s1 + $0x30] sm:$0xff]
    %v78 = vld [vmem:[%s1 + $0x38] sm:$0xff]
    %v79 = vld [vmem:[%s2] sm:$0x3]
    %v81 = vlaneseq
    %v82 = vshrl.u32 %v81, 7
    %v83 = vsub.s32 0, %v82
    %v84 = vrot.slane %v79, %v83
    %v85 = vlaneseq
    %v86 = vshrl.u32 %v85, 7
    %v87 = vsub.s32 1, %v86
    %v88 = vrot.slane %v79, %v87
    %vm91 = vcmask 261120
    %v93 = vsel %vm91, %v63, 0
    %v96 = vsel %vm91, %v64, 0
    %v99 = vsel %vm91, %v65, 0
    %v102 = vsel %vm91, %v66, 0
    %v105 = vsel %vm91, %v67, 0
    %v108 = vsel %vm91, %v68, 0
    %v111 = vsel %vm91, %v69, 0
    %v114 = vsel %vm91, %v70, 0
    %116 = vmatprep.subr.mxu0 %v72
    %117 = vmatpush1.msra.mxu0 %v71
    %118 = vmatprep.subr.mxu0 %v74
    %119 = vmatpush1.msra.mxu0 %v73
    %120 = vmatprep.subr.mxu0 %v76
    %121 = vmatpush1.msra.mxu0 %v75
    %122 = vmatprep.subr.mxu0 %v78
    %123 = vmatpush1.msra.mxu0 %v77
    %124 = vmatprep.subr.mxu0 0.0
    %125 = vmatpush1.msra.mxu0 0.0
    %126 = vmatprep.subr.mxu0 0.0
    %127 = vmatpush1.msra.mxu0 0.0
    %128 = vmatprep.subr.mxu0 0.0
    %129 = vmatpush1.msra.mxu0 0.0
    %130 = vmatprep.subr.mxu0 0.0
    %131 = vmatpush1.msra.mxu0 0.0
    %132 = vmatprep.subr.mxu0 0.0
    %133 = vmatpush1.msra.mxu0 0.0
    %134 = vmatprep.subr.mxu0 0.0
    %135 = vmatpush1.msra.mxu0 0.0
    %136 = vmatprep.subr.mxu0 0.0
    %137 = vmatpush1.msra.mxu0 0.0
    %138 = vmatprep.subr.mxu0 0.0
    %139 = vmatpush1.msra.mxu0 0.0
    %140 = vmatprep.subr.mxu0 0.0
    %141 = vmatpush1.msra.mxu0 0.0
    %142 = vmatprep.subr.mxu0 0.0
    %143 = vmatpush1.msra.mxu0 0.0
    %144 = vmatprep.subr.mxu0 0.0
    %145 = vmatpush1.msra.mxu0 0.0
    %146 = vmatprep.subr.mxu0 0.0
    %147 = vmatpush1.msra.mxu0 0.0
    %148 = vmatprep.subr.mxu0 0.0
    %149 = vmatpush1.msra.mxu0 0.0
    %150 = vmatprep.subr.mxu0 0.0
    %151 = vmatpush1.msra.mxu0 0.0
    %152 = vmatprep.subr.mxu0 0.0
    %153 = vmatpush1.msra.mxu0 0.0
    %154 = vmatprep.subr.mxu0 0.0
    %155 = vmatpush1.msra.mxu0 0.0
    %156 = vmatprep.subr.mxu0 0.0
    %157 = vmatpush1.msra.mxu0 0.0
    %158 = vmatprep.subr.mxu0 0.0
    %159 = vmatpush1.msra.mxu0 0.0
    %160 = vmatprep.subr.mxu0 0.0
    %161 = vmatpush1.msra.mxu0 0.0
    %162 = vmatprep.subr.mxu0 0.0
    %163 = vmatpush1.msra.mxu0 0.0
    %164 = vmatprep.subr.mxu0 0.0
    %165 = vmatpush1.msra.mxu0 0.0
    %166 = vmatprep.subr.mxu0 0.0
    %167 = vmatpush1.msra.mxu0 0.0
    %168 = vmatprep.subr.mxu0 0.0
    %169 = vmatpush1.msra.mxu0 0.0
    %170 = vmatprep.subr.mxu0 0.0
    %171 = vmatpush1.msra.mxu0 0.0
    %172 = vmatprep.subr.mxu0 0.0
    %173 = vmatpush1.msra.mxu0 0.0
    %174 = vmatprep.subr.mxu0 0.0
    %175 = vmatpush1.msra.mxu0 0.0
    %176 = vmatprep.subr.mxu0 0.0
    %177 = vmatpush1.msra.mxu0 0.0
    %178 = vmatprep.subr.mxu0 0.0
    %179 = vmatpush1.msra.mxu0 0.0
    %180 = vmatprep.mubr.f32.mxu0 0.0
    %181 = vmatmul.mubr.f32.gmra.mrb[0].mxu0 %v93
    %v182 = vpop.f32.mrb[0].mxu0
    %v183 = vadd.f32 %v84, %v182
    %v184 = vpop.f32.mrb[0].mxu0
    %v185 = vadd.f32 %v88, %v184
    %186 = vmatprep.mubr.f32.mxu0 0.0
    %187 = vmatmul.mubr.f32.gmra.mrb[0].mxu0 %v96
    %v188 = vpop.f32.mrb[0].mxu0
    %v189 = vadd.f32 %v84, %v188
    %v190 = vpop.f32.mrb[0].mxu0
    %v191 = vadd.f32 %v88, %v190
    %192 = vmatprep.mubr.f32.mxu0 0.0
    %193 = vmatmul.mubr.f32.gmra.mrb[0].mxu0 %v99
    %v194 = vpop.f32.mrb[0].mxu0
    %v195 = vadd.f32 %v84, %v194
    %v196 = vpop.f32.mrb[0].mxu0
    %v197 = vadd.f32 %v88, %v196
    %198 = vmatprep.mubr.f32.mxu0 0.0
    %199 = vmatmul.mubr.f32.gmra.mrb[0].mxu0 %v102
    %v200 = vpop.f32.mrb[0].mxu0
    %v201 = vadd.f32 %v84, %v200
    %v202 = vpop.f32.mrb[0].mxu0
    %v203 = vadd.f32 %v88, %v202
    %204 = vmatprep.mubr.f32.mxu0 0.0
    %205 = vmatmul.mubr.f32.gmra.mrb[0].mxu0 %v105
    %v206 = vpop.f32.mrb[0].mxu0
    %v207 = vadd.f32 %v84, %v206
    %v208 = vpop.f32.mrb[0].mxu0
    %v209 = vadd.f32 %v88, %v208
    %210 = vmatprep.mubr.f32.mxu0 0.0
    %211 = vmatmul.mubr.f32.gmra.mrb[0].mxu0 %v108
    %v212 = vpop.f32.mrb[0].mxu0
    %v213 = vadd.f32 %v84, %v212
    %v214 = vpop.f32.mrb[0].mxu0
    %v215 = vadd.f32 %v88, %v214
    %216 = vmatprep.mubr.f32.mxu0 0.0
    %217 = vmatmul.mubr.f32.gmra.mrb[0].mxu0 %v111
    %v218 = vpop.f32.mrb[0].mxu0
    %v219 = vadd.f32 %v84, %v218
    %v220 = vpop.f32.mrb[0].mxu0
    %v221 = vadd.f32 %v88, %v220
    %222 = vmatprep.mubr.f32.mxu0 0.0
    %223 = vmatmul.mubr.f32.gmra.mrb[0].mxu0 %v114
    %v224 = vpop.f32.mrb[0].mxu0
    %v225 = vadd.f32 %v84, %v224
    %v226 = vpop.f32.mrb[0].mxu0
    %v227 = vadd.f32 %v88, %v226
    %228 = vdwg.mxu0
    %v229 = vmax.f32 %v183, 0.0
    %v230 = vmax.f32 %v185, 0.0
    %v231 = vmax.f32 %v189, 0.0
    %v232 = vmax.f32 %v191, 0.0
    %v233 = vmax.f32 %v195, 0.0
    %v234 = vmax.f32 %v197, 0.0
    %v235 = vmax.f32 %v201, 0.0
    %v236 = vmax.f32 %v203, 0.0
    %v237 = vmax.f32 %v207, 0.0
    %v238 = vmax.f32 %v209, 0.0
    %v239 = vmax.f32 %v213, 0.0
    %v240 = vmax.f32 %v215, 0.0
    %v241 = vmax.f32 %v219, 0.0
    %v242 = vmax.f32 %v221, 0.0
    %v243 = vmax.f32 %v225, 0.0
    %v244 = vmax.f32 %v227, 0.0
    %v245 = vld [vmem:[#allocation3] sm:$0xff]
    %v246 = vld [vmem:[#allocation3 + $0x8] sm:$0xff]
    %v247 = vld [vmem:[#allocation3 + $0x10] sm:$0xff]
    %v248 = vld [vmem:[#allocation3 + $0x18] sm:$0xff]
    %v249 = vld [vmem:[#allocation3 + $0x20] sm:$0xff]
    %v250 = vld [vmem:[#allocation3 + $0x28] sm:$0xff]
    %v251 = vld [vmem:[#allocation3 + $0x30] sm:$0xff]
    %v252 = vld [vmem:[#allocation3 + $0x38] sm:$0xff]
    %v253 = vld [vmem:[#allocation3 + $0x40] sm:$0xff]
    %v254 = vld [vmem:[#allocation3 + $0x48] sm:$0xff]
    %v255 = vld [vmem:[#allocation3 + $0x50] sm:$0xff]
    %v256 = vld [vmem:[#allocation3 + $0x58] sm:$0xff]
    %v257 = vld [vmem:[#allocation3 + $0x60] sm:$0xff]
    %v258 = vld [vmem:[#allocation3 + $0x68] sm:$0xff]
    %v259 = vld [vmem:[#allocation3 + $0x70] sm:$0xff]
    %v260 = vld [vmem:[#allocation3 + $0x78] sm:$0xff]
    %v261 = vld [vmem:[#allocation3 + $0x80] sm:$0xff]
    %v262 = vld [vmem:[#allocation3 + $0x88] sm:$0xff]
    %v263 = vld [vmem:[#allocation3 + $0x90] sm:$0xff]
    %v264 = vld [vmem:[#allocation3 + $0x98] sm:$0xff]
    %v265 = vld [vmem:[#allocation3 + $0xa0] sm:$0xff]
    %v266 = vld [vmem:[#allocation3 + $0xa8] sm:$0xff]
    %v267 = vld [vmem:[#allocation3 + $0xb0] sm:$0xff]
    %v268 = vld [vmem:[#allocation3 + $0xb8] sm:$0xff]
    %v269 = vld [vmem:[#allocation3 + $0xc0] sm:$0xff]
    %v270 = vld [vmem:[#allocation3 + $0xc8] sm:$0xff]
    %v271 = vld [vmem:[#allocation3 + $0xd0] sm:$0xff]
    %v272 = vld [vmem:[#allocation3 + $0xd8] sm:$0xff]
    %v273 = vld [vmem:[#allocation3 + $0xe0] sm:$0xff]
    %v274 = vld [vmem:[#allocation3 + $0xe8] sm:$0xff]
    %v275 = vld [vmem:[#allocation3 + $0xf0] sm:$0xff]
    %v276 = vld [vmem:[#allocation3 + $0xf8] sm:$0xff]
    %v277 = vld [vmem:[#allocation3 + $0x100] sm:$0xff]
    %v278 = vld [vmem:[#allocation3 + $0x108] sm:$0xff]
    %v279 = vld [vmem:[#allocation3 + $0x110] sm:$0xff]
    %v280 = vld [vmem:[#allocation3 + $0x118] sm:$0xff]
    %v281 = vld [vmem:[#allocation3 + $0x120] sm:$0xff]
    %v282 = vld [vmem:[#allocation3 + $0x128] sm:$0xff]
    %v283 = vld [vmem:[#allocation3 + $0x130] sm:$0xff]
    %v284 = vld [vmem:[#allocation3 + $0x138] sm:$0xff]
    %v285 = vld [vmem:[#allocation3 + $0x140] sm:$0xff]
    %v286 = vld [vmem:[#allocation3 + $0x148] sm:$0xff]
    %v287 = vld [vmem:[#allocation3 + $0x150] sm:$0xff]
    %v288 = vld [vmem:[#allocation3 + $0x158] sm:$0xff]
    %v289 = vld [vmem:[#allocation3 + $0x160] sm:$0xff]
    %v290 = vld [vmem:[#allocation3 + $0x168] sm:$0xff]
    %v291 = vld [vmem:[#allocation3 + $0x170] sm:$0xff]
    %v292 = vld [vmem:[#allocation3 + $0x178] sm:$0xff]
    %v293 = vld [vmem:[#allocation3 + $0x180] sm:$0xff]
    %v294 = vld [vmem:[#allocation3 + $0x188] sm:$0xff]
    %v295 = vld [vmem:[#allocation3 + $0x190] sm:$0xff]
    %v296 = vld [vmem:[#allocation3 + $0x198] sm:$0xff]
    %v297 = vld [vmem:[#allocation3 + $0x1a0] sm:$0xff]
    %v298 = vld [vmem:[#allocation3 + $0x1a8] sm:$0xff]
    %v299 = vld [vmem:[#allocation3 + $0x1b0] sm:$0xff]
    %v300 = vld [vmem:[#allocation3 + $0x1b8] sm:$0xff]
    %v301 = vld [vmem:[#allocation3 + $0x1c0] sm:$0xff]
    %v302 = vld [vmem:[#allocation3 + $0x1c8] sm:$0xff]
    %v303 = vld [vmem:[#allocation3 + $0x1d0] sm:$0xff]
    %v304 = vld [vmem:[#allocation3 + $0x1d8] sm:$0xff]
    %v305 = vld [vmem:[#allocation3 + $0x1e0] sm:$0xff]
    %v306 = vld [vmem:[#allocation3 + $0x1e8] sm:$0xff]
    %v307 = vld [vmem:[#allocation3 + $0x1f0] sm:$0xff]
    %v308 = vld [vmem:[#allocation3 + $0x1f8] sm:$0xff]
    %v309 = vld [vmem:[#allocation3 + $0x200] sm:$0xff]
    %v310 = vld [vmem:[#allocation3 + $0x208] sm:$0xff]
    %v311 = vld [vmem:[#allocation3 + $0x210] sm:$0xff]
    %v312 = vld [vmem:[#allocation3 + $0x218] sm:$0xff]
    %v313 = vld [vmem:[#allocation3 + $0x220] sm:$0xff]
    %v314 = vld [vmem:[#allocation3 + $0x228] sm:$0xff]
    %v315 = vld [vmem:[#allocation3 + $0x230] sm:$0xff]
    %v316 = vld [vmem:[#allocation3 + $0x238] sm:$0xff]
    %v317 = vld [vmem:[#allocation3 + $0x240] sm:$0xff]
    %v318 = vld [vmem:[#allocation3 + $0x248] sm:$0xff]
    %v319 = vld [vmem:[#allocation3 + $0x250] sm:$0xff]
    %v320 = vld [vmem:[#allocation3 + $0x258] sm:$0xff]
    %v321 = vld [vmem:[#allocation3 + $0x260] sm:$0xff]
    %v322 = vld [vmem:[#allocation3 + $0x268] sm:$0xff]
    %v323 = vld [vmem:[#allocation3 + $0x270] sm:$0xff]
    %v324 = vld [vmem:[#allocation3 + $0x278] sm:$0xff]
    %v325 = vld [vmem:[#allocation3 + $0x280] sm:$0xff]
    %v326 = vld [vmem:[#allocation3 + $0x288] sm:$0xff]
    %v327 = vld [vmem:[#allocation3 + $0x290] sm:$0xff]
    %v328 = vld [vmem:[#allocation3 + $0x298] sm:$0xff]
    %v329 = vld [vmem:[#allocation3 + $0x2a0] sm:$0xff]
    %v330 = vld [vmem:[#allocation3 + $0x2a8] sm:$0xff]
    %v331 = vld [vmem:[#allocation3 + $0x2b0] sm:$0xff]
    %v332 = vld [vmem:[#allocation3 + $0x2b8] sm:$0xff]
    %v333 = vld [vmem:[#allocation3 + $0x2c0] sm:$0xff]
    %v334 = vld [vmem:[#allocation3 + $0x2c8] sm:$0xff]
    %v335 = vld [vmem:[#allocation3 + $0x2d0] sm:$0xff]
    %v336 = vld [vmem:[#allocation3 + $0x2d8] sm:$0xff]
    %v337 = vld [vmem:[#allocation3 + $0x2e0] sm:$0xff]
    %v338 = vld [vmem:[#allocation3 + $0x2e8] sm:$0xff]
    %v339 = vld [vmem:[#allocation3 + $0x2f0] sm:$0xff]
    %v340 = vld [vmem:[#allocation3 + $0x2f8] sm:$0xff]
    %v341 = vld [vmem:[#allocation3 + $0x300] sm:$0xff]
    %v342 = vld [vmem:[#allocation3 + $0x308] sm:$0xff]
    %v343 = vld [vmem:[#allocation3 + $0x310] sm:$0xff]
    %v344 = vld [vmem:[#allocation3 + $0x318] sm:$0xff]
    %v345 = vld [vmem:[#allocation3 + $0x320] sm:$0xff]
    %v346 = vld [vmem:[#allocation3 + $0x328] sm:$0xff]
    %v347 = vld [vmem:[#allocation3 + $0x330] sm:$0xff]
    %v348 = vld [vmem:[#allocation3 + $0x338] sm:$0xff]
    %v349 = vld [vmem:[#allocation3 + $0x340] sm:$0xff]
    %v350 = vld [vmem:[#allocation3 + $0x348] sm:$0xff]
    %v351 = vld [vmem:[#allocation3 + $0x350] sm:$0xff]
    %v352 = vld [vmem:[#allocation3 + $0x358] sm:$0xff]
    %v353 = vld [vmem:[#allocation3 + $0x360] sm:$0xff]
    %v354 = vld [vmem:[#allocation3 + $0x368] sm:$0xff]
    %v355 = vld [vmem:[#allocation3 + $0x370] sm:$0xff]
    %v356 = vld [vmem:[#allocation3 + $0x378] sm:$0xff]
    %v357 = vld [vmem:[#allocation3 + $0x380] sm:$0xff]
    %v358 = vld [vmem:[#allocation3 + $0x388] sm:$0xff]
    %v359 = vld [vmem:[#allocation3 + $0x390] sm:$0xff]
    %v360 = vld [vmem:[#allocation3 + $0x398] sm:$0xff]
    %v361 = vld [vmem:[#allocation3 + $0x3a0] sm:$0xff]
    %v362 = vld [vmem:[#allocation3 + $0x3a8] sm:$0xff]
    %v363 = vld [vmem:[#allocation3 + $0x3b0] sm:$0xff]
    %v364 = vld [vmem:[#allocation3 + $0x3b8] sm:$0xff]
    %v365 = vld [vmem:[#allocation3 + $0x3c0] sm:$0xff]
    %v366 = vld [vmem:[#allocation3 + $0x3c8] sm:$0xff]
    %v367 = vld [vmem:[#allocation3 + $0x3d0] sm:$0xff]
    %v368 = vld [vmem:[#allocation3 + $0x3d8] sm:$0xff]
    %v369 = vld [vmem:[#allocation3 + $0x3e0] sm:$0xff]
    %v370 = vld [vmem:[#allocation3 + $0x3e8] sm:$0xff]
    %v371 = vld [vmem:[#allocation3 + $0x3f0] sm:$0xff]
    %v372 = vld [vmem:[#allocation3 + $0x3f8] sm:$0xff]
    %v373 = vld [vmem:[%s4] sm:$0xf]
    %v375 = vlaneseq
    %v376 = vshrl.u32 %v375, 7
    %v377 = vsub.s32 0, %v376
    %v378 = vrot.slane %v373, %v377
    %v379 = vlaneseq
    %v380 = vshrl.u32 %v379, 7
    %v381 = vsub.s32 1, %v380
    %v382 = vrot.slane %v373, %v381
    %v383 = vlaneseq
    %v384 = vshrl.u32 %v383, 7
    %v385 = vsub.s32 2, %v384
    %v386 = vrot.slane %v373, %v385
    %v387 = vlaneseq
    %v388 = vshrl.u32 %v387, 7
    %v389 = vsub.s32 3, %v388
    %v390 = vrot.slane %v373, %v389
    %395 = vmatprep.subr.mxu0 %v246
    %396 = vmatpush1.msra.mxu0 %v245
    %397 = vmatprep.subr.mxu0 %v250
    %398 = vmatpush1.msra.mxu0 %v249
    %399 = vmatprep.subr.mxu0 %v254
    %400 = vmatpush1.msra.mxu0 %v253
    %401 = vmatprep.subr.mxu0 %v258
    %402 = vmatpush1.msra.mxu0 %v257
    %403 = vmatprep.subr.mxu0 %v262
    %404 = vmatpush1.msra.mxu0 %v261
    %405 = vmatprep.subr.mxu0 %v266
    %406 = vmatpush1.msra.mxu0 %v265
    %407 = vmatprep.subr.mxu0 %v270
    %408 = vmatpush1.msra.mxu0 %v269
    %409 = vmatprep.subr.mxu0 %v274
    %410 = vmatpush1.msra.mxu0 %v273
    %411 = vmatprep.subr.mxu0 %v278
    %412 = vmatpush1.msra.mxu0 %v277
    %413 = vmatprep.subr.mxu0 %v282
    %414 = vmatpush1.msra.mxu0 %v281
    %415 = vmatprep.subr.mxu0 %v286
    %416 = vmatpush1.msra.mxu0 %v285
    %417 = vmatprep.subr.mxu0 %v290
    %418 = vmatpush1.msra.mxu0 %v289
    %419 = vmatprep.subr.mxu0 %v294
    %420 = vmatpush1.msra.mxu0 %v293
    %421 = vmatprep.subr.mxu0 %v298
    %422 = vmatpush1.msra.mxu0 %v297
    %423 = vmatprep.subr.mxu0 %v302
    %424 = vmatpush1.msra.mxu0 %v301
    %425 = vmatprep.subr.mxu0 %v306
    %426 = vmatpush1.msra.mxu0 %v305
    %427 = vmatprep.subr.mxu0 %v310
    %428 = vmatpush1.msra.mxu0 %v309
    %429 = vmatprep.subr.mxu0 %v314
    %430 = vmatpush1.msra.mxu0 %v313
    %431 = vmatprep.subr.mxu0 %v318
    %432 = vmatpush1.msra.mxu0 %v317
    %433 = vmatprep.subr.mxu0 %v322
    %434 = vmatpush1.msra.mxu0 %v321
    %435 = vmatprep.subr.mxu0 %v326
    %436 = vmatpush1.msra.mxu0 %v325
    %437 = vmatprep.subr.mxu0 %v330
    %438 = vmatpush1.msra.mxu0 %v329
    %439 = vmatprep.subr.mxu0 %v334
    %440 = vmatpush1.msra.mxu0 %v333
    %441 = vmatprep.subr.mxu0 %v338
    %442 = vmatpush1.msra.mxu0 %v337
    %443 = vmatprep.subr.mxu0 %v342
    %444 = vmatpush1.msra.mxu0 %v341
    %445 = vmatprep.subr.mxu0 %v346
    %446 = vmatpush1.msra.mxu0 %v345
    %447 = vmatprep.subr.mxu0 %v350
    %448 = vmatpush1.msra.mxu0 %v349
    %449 = vmatprep.subr.mxu0 %v354
    %450 = vmatpush1.msra.mxu0 %v353
    %451 = vmatprep.subr.mxu0 %v358
    %452 = vmatpush1.msra.mxu0 %v357
    %453 = vmatprep.subr.mxu0 %v362
    %454 = vmatpush1.msra.mxu0 %v361
    %455 = vmatprep.subr.mxu0 %v366
    %456 = vmatpush1.msra.mxu0 %v365
    %457 = vmatprep.subr.mxu0 %v370
    %458 = vmatpush1.msra.mxu0 %v369
    %459 = vmatprep.mubr.f32.mxu0 %v230
    %460 = vmatmul.mubr.f32.gmra.mrb[0].mxu0 %v229
    %v461 = vpop.f32.mrb[0].mxu0
    %v462 = vadd.f32 %v378, %v461
    %v463 = vpop.f32.mrb[0].mxu0
    %v464 = vadd.f32 %v382, %v463
    %465 = vmatprep.mubr.f32.mxu0 %v232
    %466 = vmatmul.mubr.f32.gmra.mrb[0].mxu0 %v231
    %v467 = vpop.f32.mrb[0].mxu0
    %v468 = vadd.f32 %v378, %v467
    %v469 = vpop.f32.mrb[0].mxu0
    %v470 = vadd.f32 %v382, %v469
    %471 = vmatprep.mubr.f32.mxu0 %v234
    %472 = vmatmul.mubr.f32.gmra.mrb[0].mxu0 %v233
    %v473 = vpop.f32.mrb[0].mxu0
    %v474 = vadd.f32 %v378, %v473
    %v475 = vpop.f32.mrb[0].mxu0
    %v476 = vadd.f32 %v382, %v475
    %477 = vmatprep.mubr.f32.mxu0 %v236
    %478 = vmatmul.mubr.f32.gmra.mrb[0].mxu0 %v235
    %v479 = vpop.f32.mrb[0].mxu0
    %v480 = vadd.f32 %v378, %v479
    %v481 = vpop.f32.mrb[0].mxu0
    %v482 = vadd.f32 %v382, %v481
    %483 = vmatprep.mubr.f32.mxu0 %v238
    %484 = vmatmul.mubr.f32.gmra.mrb[0].mxu0 %v237
    %v485 = vpop.f32.mrb[0].mxu0
    %v486 = vadd.f32 %v378, %v485
    %v487 = vpop.f32.mrb[0].mxu0
    %v488 = vadd.f32 %v382, %v487
    %489 = vmatprep.mubr.f32.mxu0 %v240
    %490 = vmatmul.mubr.f32.gmra.mrb[0].mxu0 %v239
    %v491 = vpop.f32.mrb[0].mxu0
    %v492 = vadd.f32 %v378, %v491
    %v493 = vpop.f32.mrb[0].mxu0
    %v494 = vadd.f32 %v382, %v493
    %495 = vmatprep.mubr.f32.mxu0 %v242
    %496 = vmatmul.mubr.f32.gmra.mrb[0].mxu0 %v241
    %v497 = vpop.f32.mrb[0].mxu0
    %v498 = vadd.f32 %v378, %v497
    %v499 = vpop.f32.mrb[0].mxu0
    %v500 = vadd.f32 %v382, %v499
    %501 = vmatprep.mubr.f32.mxu0 %v244
    %502 = vmatmul.mubr.f32.gmra.mrb[0].mxu0 %v243
    %v503 = vpop.f32.mrb[0].mxu0
    %v504 = vadd.f32 %v378, %v503
    %v505 = vpop.f32.mrb[0].mxu0
    %v506 = vadd.f32 %v382, %v505
    %507 = vdwg.mxu0
    %508 = vmatprep.subr.mxu0 %v248
    %509 = vmatpush1.msra.mxu0 %v247
    %510 = vmatprep.subr.mxu0 %v252
    %511 = vmatpush1.msra.mxu0 %v251
    %512 = vmatprep.subr.mxu0 %v256
    %513 = vmatpush1.msra.mxu0 %v255
    %514 = vmatprep.subr.mxu0 %v260
    %515 = vmatpush1.msra.mxu0 %v259
    %516 = vmatprep.subr.mxu0 %v264
    %517 = vmatpush1.msra.mxu0 %v263
    %518 = vmatprep.subr.mxu0 %v268
    %519 = vmatpush1.msra.mxu0 %v267
    %520 = vmatprep.subr.mxu0 %v272
    %521 = vmatpush1.msra.mxu0 %v271
    %522 = vmatprep.subr.mxu0 %v276
    %523 = vmatpush1.msra.mxu0 %v275
    %524 = vmatprep.subr.mxu0 %v280
    %525 = vmatpush1.msra.mxu0 %v279
    %526 = vmatprep.subr.mxu0 %v284
    %527 = vmatpush1.msra.mxu0 %v283
    %528 = vmatprep.subr.mxu0 %v288
    %529 = vmatpush1.msra.mxu0 %v287
    %530 = vmatprep.subr.mxu0 %v292
    %531 = vmatpush1.msra.mxu0 %v291
    %532 = vmatprep.subr.mxu0 %v296
    %533 = vmatpush1.msra.mxu0 %v295
    %534 = vmatprep.subr.mxu0 %v300
    %535 = vmatpush1.msra.mxu0 %v299
    %536 = vmatprep.subr.mxu0 %v304
    %537 = vmatpush1.msra.mxu0 %v303
    %538 = vmatprep.subr.mxu0 %v308
    %539 = vmatpush1.msra.mxu0 %v307
    %540 = vmatprep.subr.mxu0 %v312
    %541 = vmatpush1.msra.mxu0 %v311
    %542 = vmatprep.subr.mxu0 %v316
    %543 = vmatpush1.msra.mxu0 %v315
    %544 = vmatprep.subr.mxu0 %v320
    %545 = vmatpush1.msra.mxu0 %v319
    %546 = vmatprep.subr.mxu0 %v324
    %547 = vmatpush1.msra.mxu0 %v323
    %548 = vmatprep.subr.mxu0 %v328
    %549 = vmatpush1.msra.mxu0 %v327
    %550 = vmatprep.subr.mxu0 %v332
    %551 = vmatpush1.msra.mxu0 %v331
    %552 = vmatprep.subr.mxu0 %v336
    %553 = vmatpush1.msra.mxu0 %v335
    %554 = vmatprep.subr.mxu0 %v340
    %555 = vmatpush1.msra.mxu0 %v339
    %556 = vmatprep.subr.mxu0 %v344
    %557 = vmatpush1.msra.mxu0 %v343
    %558 = vmatprep.subr.mxu0 %v348
    %559 = vmatpush1.msra.mxu0 %v347
    %560 = vmatprep.subr.mxu0 %v352
    %561 = vmatpush1.msra.mxu0 %v351
    %562 = vmatprep.subr.mxu0 %v356
    %563 = vmatpush1.msra.mxu0 %v355
    %564 = vmatprep.subr.mxu0 %v360
    %565 = vmatpush1.msra.mxu0 %v359
    %566 = vmatprep.subr.mxu0 %v364
    %567 = vmatpush1.msra.mxu0 %v363
    %568 = vmatprep.subr.mxu0 %v368
    %569 = vmatpush1.msra.mxu0 %v367
    %570 = vmatprep.subr.mxu0 %v372
    %571 = vmatpush1.msra.mxu0 %v371
    %572 = vmatprep.mubr.f32.mxu0 %v230
    %573 = vmatmul.mubr.f32.gmra.mrb[0].mxu0 %v229
    %v574 = vpop.f32.mrb[0].mxu0
    %v575 = vadd.f32 %v386, %v574
    %v576 = vpop.f32.mrb[0].mxu0
    %v577 = vadd.f32 %v390, %v576
    %578 = vmatprep.mubr.f32.mxu0 %v232
    %579 = vmatmul.mubr.f32.gmra.mrb[0].mxu0 %v231
    %v580 = vpop.f32.mrb[0].mxu0
    %v581 = vadd.f32 %v386, %v580
    %v582 = vpop.f32.mrb[0].mxu0
    %v583 = vadd.f32 %v390, %v582
    %584 = vmatprep.mubr.f32.mxu0 %v234
    %585 = vmatmul.mubr.f32.gmra.mrb[0].mxu0 %v233
    %v586 = vpop.f32.mrb[0].mxu0
    %v587 = vadd.f32 %v386, %v586
    %v588 = vpop.f32.mrb[0].mxu0
    %v589 = vadd.f32 %v390, %v588
    %590 = vmatprep.mubr.f32.mxu0 %v236
    %591 = vmatmul.mubr.f32.gmra.mrb[0].mxu0 %v235
    %v592 = vpop.f32.mrb[0].mxu0
    %v593 = vadd.f32 %v386, %v592
    %v594 = vpop.f32.mrb[0].mxu0
    %v595 = vadd.f32 %v390, %v594
    %596 = vmatprep.mubr.f32.mxu0 %v238
    %597 = vmatmul.mubr.f32.gmra.mrb[0].mxu0 %v237
    %v598 = vpop.f32.mrb[0].mxu0
    %v599 = vadd.f32 %v386, %v598
    %v600 = vpop.f32.mrb[0].mxu0
    %v601 = vadd.f32 %v390, %v600
    %602 = vmatprep.mubr.f32.mxu0 %v240
    %603 = vmatmul.mubr.f32.gmra.mrb[0].mxu0 %v239
    %v604 = vpop.f32.mrb[0].mxu0
    %v605 = vadd.f32 %v386, %v604
    %v606 = vpop.f32.mrb[0].mxu0
    %v607 = vadd.f32 %v390, %v606
    %608 = vmatprep.mubr.f32.mxu0 %v242
    %609 = vmatmul.mubr.f32.gmra.mrb[0].mxu0 %v241
    %v610 = vpop.f32.mrb[0].mxu0
    %v611 = vadd.f32 %v386, %v610
    %v612 = vpop.f32.mrb[0].mxu0
    %v613 = vadd.f32 %v390, %v612
    %614 = vmatprep.mubr.f32.mxu0 %v244
    %615 = vmatmul.mubr.f32.gmra.mrb[0].mxu0 %v243
    %v616 = vpop.f32.mrb[0].mxu0
    %v617 = vadd.f32 %v386, %v616
    %v618 = vpop.f32.mrb[0].mxu0
    %v619 = vadd.f32 %v390, %v618
    %620 = vdwg.mxu0
    %v621 = vmax.f32 %v462, 0.0
    %v622 = vmax.f32 %v464, 0.0
    %v623 = vmax.f32 %v575, 0.0
    %v624 = vmax.f32 %v577, 0.0
    %v625 = vmax.f32 %v468, 0.0
    %v626 = vmax.f32 %v470, 0.0
    %v627 = vmax.f32 %v581, 0.0
    %v628 = vmax.f32 %v583, 0.0
    %v629 = vmax.f32 %v474, 0.0
    %v630 = vmax.f32 %v476, 0.0
    %v631 = vmax.f32 %v587, 0.0
    %v632 = vmax.f32 %v589, 0.0
    %v633 = vmax.f32 %v480, 0.0
    %v634 = vmax.f32 %v482, 0.0
    %v635 = vmax.f32 %v593, 0.0
    %v636 = vmax.f32 %v595, 0.0
    %v637 = vmax.f32 %v486, 0.0
    %v638 = vmax.f32 %v488, 0.0
    %v639 = vmax.f32 %v599, 0.0
    %v640 = vmax.f32 %v601, 0.0
    %v641 = vmax.f32 %v492, 0.0
    %v642 = vmax.f32 %v494, 0.0
    %v643 = vmax.f32 %v605, 0.0
    %v644 = vmax.f32 %v607, 0.0
    %v645 = vmax.f32 %v498, 0.0
    %v646 = vmax.f32 %v500, 0.0
    %v647 = vmax.f32 %v611, 0.0
    %v648 = vmax.f32 %v613, 0.0
    %v649 = vmax.f32 %v504, 0.0
    %v650 = vmax.f32 %v506, 0.0
    %v651 = vmax.f32 %v617, 0.0
    %v652 = vmax.f32 %v619, 0.0
    %v653 = vld [vmem:[#allocation6] sm:$0xff]
    %v654 = vld [vmem:[#allocation6 + $0x8] sm:$0xff]
    %v655 = vld [vmem:[#allocation6 + $0x10] sm:$0xff]
    %v656 = vld [vmem:[#allocation6 + $0x18] sm:$0xff]
    %v657 = vld [vmem:[#allocation6 + $0x20] sm:$0xff]
    %v658 = vld [vmem:[#allocation6 + $0x28] sm:$0xff]
    %v659 = vld [vmem:[#allocation6 + $0x30] sm:$0xff]
    %v660 = vld [vmem:[#allocation6 + $0x38] sm:$0xff]
    %v661 = vld [vmem:[#allocation6 + $0x40] sm:$0xff]
    %v662 = vld [vmem:[#allocation6 + $0x48] sm:$0xff]
    %v663 = vld [vmem:[#allocation6 + $0x50] sm:$0xff]
    %v664 = vld [vmem:[#allocation6 + $0x58] sm:$0xff]
    %v665 = vld [vmem:[#allocation6 + $0x60] sm:$0xff]
    %v666 = vld [vmem:[#allocation6 + $0x68] sm:$0xff]
    %v667 = vld [vmem:[#allocation6 + $0x70] sm:$0xff]
    %v668 = vld [vmem:[#allocation6 + $0x78] sm:$0xff]
    %v669 = vld [vmem:[#allocation6 + $0x80] sm:$0xff]
    %v670 = vld [vmem:[#allocation6 + $0x88] sm:$0xff]
    %v671 = vld [vmem:[#allocation6 + $0x90] sm:$0xff]
    %v672 = vld [vmem:[#allocation6 + $0x98] sm:$0xff]
    %v673 = vld [vmem:[#allocation6 + $0xa0] sm:$0xff]
    %v674 = vld [vmem:[#allocation6 + $0xa8] sm:$0xff]
    %v675 = vld [vmem:[#allocation6 + $0xb0] sm:$0xff]
    %v676 = vld [vmem:[#allocation6 + $0xb8] sm:$0xff]
    %v677 = vld [vmem:[#allocation6 + $0xc0] sm:$0xff]
    %v678 = vld [vmem:[#allocation6 + $0xc8] sm:$0xff]
    %v679 = vld [vmem:[#allocation6 + $0xd0] sm:$0xff]
    %v680 = vld [vmem:[#allocation6 + $0xd8] sm:$0xff]
    %v681 = vld [vmem:[#allocation6 + $0xe0] sm:$0xff]
    %v682 = vld [vmem:[#allocation6 + $0xe8] sm:$0xff]
    %v683 = vld [vmem:[#allocation6 + $0xf0] sm:$0xff]
    %v684 = vld [vmem:[#allocation6 + $0xf8] sm:$0xff]
    %v685 = vld [vmem:[%s6] sm:$0x1]
    %v687 = vlaneseq
    %v688 = vshrl.u32 %v687, 7
    %v689 = vsub.s32 0, %v688
    %v690 = vrot.slane %v685, %v689
    %692 = vmatprep.subr.mxu0 0.0
    %693 = vmatpush1.msra.mxu0 %v653
    %694 = vmatprep.subr.mxu0 0.0
    %695 = vmatpush1.msra.mxu0 %v654
    %696 = vmatprep.subr.mxu0 0.0
    %697 = vmatpush1.msra.mxu0 %v655
    %698 = vmatprep.subr.mxu0 0.0
    %699 = vmatpush1.msra.mxu0 %v656
    %700 = vmatprep.subr.mxu0 0.0
    %701 = vmatpush1.msra.mxu0 %v657
    %702 = vmatprep.subr.mxu0 0.0
    %703 = vmatpush1.msra.mxu0 %v658
    %704 = vmatprep.subr.mxu0 0.0
    %705 = vmatpush1.msra.mxu0 %v659
    %706 = vmatprep.subr.mxu0 0.0
    %707 = vmatpush1.msra.mxu0 %v660
    %708 = vmatprep.subr.mxu0 0.0
    %709 = vmatpush1.msra.mxu0 %v661
    %710 = vmatprep.subr.mxu0 0.0
    %711 = vmatpush1.msra.mxu0 %v662
    %712 = vmatprep.subr.mxu0 0.0
    %713 = vmatpush1.msra.mxu0 %v663
    %714 = vmatprep.subr.mxu0 0.0
    %715 = vmatpush1.msra.mxu0 %v664
    %716 = vmatprep.subr.mxu0 0.0
    %717 = vmatpush1.msra.mxu0 %v665
    %718 = vmatprep.subr.mxu0 0.0
    %719 = vmatpush1.msra.mxu0 %v666
    %720 = vmatprep.subr.mxu0 0.0
    %721 = vmatpush1.msra.mxu0 %v667
    %722 = vmatprep.subr.mxu0 0.0
    %723 = vmatpush1.msra.mxu0 %v668
    %724 = vmatprep.subr.mxu0 0.0
    %725 = vmatpush1.msra.mxu0 %v669
    %726 = vmatprep.subr.mxu0 0.0
    %727 = vmatpush1.msra.mxu0 %v670
    %728 = vmatprep.subr.mxu0 0.0
    %729 = vmatpush1.msra.mxu0 %v671
    %730 = vmatprep.subr.mxu0 0.0
    %731 = vmatpush1.msra.mxu0 %v672
    %732 = vmatprep.subr.mxu0 0.0
    %733 = vmatpush1.msra.mxu0 %v673
    %734 = vmatprep.subr.mxu0 0.0
    %735 = vmatpush1.msra.mxu0 %v674
    %736 = vmatprep.subr.mxu0 0.0
    %737 = vmatpush1.msra.mxu0 %v675
    %738 = vmatprep.subr.mxu0 0.0
    %739 = vmatpush1.msra.mxu0 %v676
    %740 = vmatprep.subr.mxu0 0.0
    %741 = vmatpush1.msra.mxu0 %v677
    %742 = vmatprep.subr.mxu0 0.0
    %743 = vmatpush1.msra.mxu0 %v678
    %744 = vmatprep.subr.mxu0 0.0
    %745 = vmatpush1.msra.mxu0 %v679
    %746 = vmatprep.subr.mxu0 0.0
    %747 = vmatpush1.msra.mxu0 %v680
    %748 = vmatprep.subr.mxu0 0.0
    %749 = vmatpush1.msra.mxu0 %v681
    %750 = vmatprep.subr.mxu0 0.0
    %751 = vmatpush1.msra.mxu0 %v682
    %752 = vmatprep.subr.mxu0 0.0
    %753 = vmatpush1.msra.mxu0 %v683
    %754 = vmatprep.subr.mxu0 0.0
    %755 = vmatpush1.msra.mxu0 %v684
    %756 = vmatprep.mubr.f32.mxu0 %v622
    %757 = vmatmul.mubr.f32.gmra.mrb[0].mxu0 %v621
    %v758 = vpop.f32.mrb[0].mxu0
    %v759 = vadd.f32 %v690, %v758
    %v760 = vpop.f32.mrb[0].mxu0
    %761 = vmatprep.mubr.f32.mxu0 %v626
    %762 = vmatmul.mubr.f32.gmra.mrb[0].mxu0 %v625
    %v763 = vpop.f32.mrb[0].mxu0
    %v764 = vadd.f32 %v690, %v763
    %v765 = vpop.f32.mrb[0].mxu0
    %766 = vmatprep.mubr.f32.mxu0 %v630
    %767 = vmatmul.mubr.f32.gmra.mrb[0].mxu0 %v629
    %v768 = vpop.f32.mrb[0].mxu0
    %v769 = vadd.f32 %v690, %v768
    %v770 = vpop.f32.mrb[0].mxu0
    %771 = vmatprep.mubr.f32.mxu0 %v634
    %772 = vmatmul.mubr.f32.gmra.mrb[0].mxu0 %v633
    %v773 = vpop.f32.mrb[0].mxu0
    %v774 = vadd.f32 %v690, %v773
    %v775 = vpop.f32.mrb[0].mxu0
    %776 = vmatprep.mubr.f32.mxu0 %v638
    %777 = vmatmul.mubr.f32.gmra.mrb[0].mxu0 %v637
    %v778 = vpop.f32.mrb[0].mxu0
    %v779 = vadd.f32 %v690, %v778
    %v780 = vpop.f32.mrb[0].mxu0
    %781 = vmatprep.mubr.f32.mxu0 %v642
    %782 = vmatmul.mubr.f32.gmra.mrb[0].mxu0 %v641
    %v783 = vpop.f32.mrb[0].mxu0
    %v784 = vadd.f32 %v690, %v783
    %v785 = vpop.f32.mrb[0].mxu0
    %786 = vmatprep.mubr.f32.mxu0 %v646
    %787 = vmatmul.mubr.f32.gmra.mrb[0].mxu0 %v645
    %v788 = vpop.f32.mrb[0].mxu0
    %v789 = vadd.f32 %v690, %v788
    %v790 = vpop.f32.mrb[0].mxu0
    %791 = vmatprep.mubr.f32.mxu0 %v650
    %792 = vmatmul.mubr.f32.gmra.mrb[0].mxu0 %v649
    %v793 = vpop.f32.mrb[0].mxu0
    %v794 = vadd.f32 %v690, %v793
    %v795 = vpop.f32.mrb[0].mxu0
    %796 = vdwg.mxu0
    %v797 = vlaneseq
    %v798 = vand.u32 %v797, 127
    %vm799 = vcmp.lt.s32.totalorder %v798, 8
    %v800 = vsel %vm799, %v759, -1e+30
    %v801 = vsel %vm799, %v764, -1e+30
    %v802 = vsel %vm799, %v769, -1e+30
    %v803 = vsel %vm799, %v774, -1e+30
    %v804 = vsel %vm799, %v779, -1e+30
    %v805 = vsel %vm799, %v784, -1e+30
    %v806 = vsel %vm799, %v789, -1e+30
    %v807 = vsel %vm799, %v794, -1e+30
    %808 = vmax.xlane.f32.xlu0 %v800
    %v809 = vpop.xlane.xlu0 %808
    %810 = vmax.xlane.f32.xlu0 %v801
    %v811 = vpop.xlane.xlu0 %810
    %812 = vmax.xlane.f32.xlu0 %v802
    %v813 = vpop.xlane.xlu0 %812
    %814 = vmax.xlane.f32.xlu0 %v803
    %v815 = vpop.xlane.xlu0 %814
    %816 = vmax.xlane.f32.xlu0 %v804
    %v817 = vpop.xlane.xlu0 %816
    %818 = vmax.xlane.f32.xlu0 %v805
    %v819 = vpop.xlane.xlu0 %818
    %820 = vmax.xlane.f32.xlu0 %v806
    %v821 = vpop.xlane.xlu0 %820
    %822 = vmax.xlane.f32.xlu0 %v807
    %v823 = vpop.xlane.xlu0 %822
    %v824 = vsub.f32 %v800, %v809
    %v825 = vsub.f32 %v801, %v811
    %v826 = vsub.f32 %v802, %v813
    %v827 = vsub.f32 %v803, %v815
    %v828 = vsub.f32 %v804, %v817
    %v829 = vsub.f32 %v805, %v819
    %v830 = vsub.f32 %v806, %v821
    %v831 = vsub.f32 %v807, %v823
    %v832 = vmul.f32 %v824, 1.442695
    %v833 = vpow.pop %v832
    %v834 = vmul.f32 %v825, 1.442695
    %v835 = vpow.pop %v834
    %v836 = vmul.f32 %v826, 1.442695
    %v837 = vpow.pop %v836
    %v838 = vmul.f32 %v827, 1.442695
    %v839 = vpow.pop %v838
    %v840 = vmul.f32 %v828, 1.442695
    %v841 = vpow.pop %v840
    %v842 = vmul.f32 %v829, 1.442695
    %v843 = vpow.pop %v842
    %v844 = vmul.f32 %v830, 1.442695
    %v845 = vpow.pop %v844
    %v846 = vmul.f32 %v831, 1.442695
    %v847 = vpow.pop %v846
    %848 = vadd.xlane.f32.xlu0 %v833
    %v849 = vpop.xlane.xlu0 %848
    %850 = vadd.xlane.f32.xlu0 %v835
    %v851 = vpop.xlane.xlu0 %850
    %852 = vadd.xlane.f32.xlu0 %v837
    %v853 = vpop.xlane.xlu0 %852
    %854 = vadd.xlane.f32.xlu0 %v839
    %v855 = vpop.xlane.xlu0 %854
    %856 = vadd.xlane.f32.xlu0 %v841
    %v857 = vpop.xlane.xlu0 %856
    %858 = vadd.xlane.f32.xlu0 %v843
    %v859 = vpop.xlane.xlu0 %858
    %860 = vadd.xlane.f32.xlu0 %v845
    %v861 = vpop.xlane.xlu0 %860
    %862 = vadd.xlane.f32.xlu0 %v847
    %v863 = vpop.xlane.xlu0 %862
    %v864 = vrcp.pop %v849
    %v865 = vmul.f32 %v833, %v864
    %v866 = vrcp.pop %v851
    %v867 = vmul.f32 %v835, %v866
    %v868 = vrcp.pop %v853
    %v869 = vmul.f32 %v837, %v868
    %v870 = vrcp.pop %v855
    %v871 = vmul.f32 %v839, %v870
    %v872 = vrcp.pop %v857
    %v873 = vmul.f32 %v841, %v872
    %v874 = vrcp.pop %v859
    %v875 = vmul.f32 %v843, %v874
    %v876 = vrcp.pop %v861
    %v877 = vmul.f32 %v845, %v876
    %v878 = vrcp.pop %v863
    %v879 = vmul.f32 %v847, %v878
    %v880 = vld [vmem:[%s7] sm:$0x3]
    %v882 = vlaneseq
    %v883 = vshrl.u32 %v882, 7
    %v884 = vsub.s32 0, %v883
    %v885 = vrot.slane %v880, %v884
    %v886 = vlaneseq
    %v887 = vshrl.u32 %v886, 7
    %v888 = vsub.s32 1, %v887
    %v889 = vrot.slane %v880, %v888
    %v892 = vmul.f32 %v623, %v885
    %v893 = vmul.f32 %v624, %v889
    %v894 = vmul.f32 %v627, %v885
    %v895 = vmul.f32 %v628, %v889
    %v896 = vmul.f32 %v631, %v885
    %v897 = vmul.f32 %v632, %v889
    %v898 = vmul.f32 %v635, %v885
    %v899 = vmul.f32 %v636, %v889
    %v900 = vmul.f32 %v639, %v885
    %v901 = vmul.f32 %v640, %v889
    %v902 = vmul.f32 %v643, %v885
    %v903 = vmul.f32 %v644, %v889
    %v904 = vmul.f32 %v647, %v885
    %v905 = vmul.f32 %v648, %v889
    %v906 = vmul.f32 %v651, %v885
    %v907 = vmul.f32 %v652, %v889
    %v908 = vadd.f32 %v892, %v893
    %909 = vadd.xlane.f32.xlu0 %v908
    %v910 = vpop.xlane.xlu0 %909
    %v911 = vadd.f32 %v894, %v895
    %912 = vadd.xlane.f32.xlu0 %v911
    %v913 = vpop.xlane.xlu0 %912
    %v914 = vadd.f32 %v896, %v897
    %915 = vadd.xlane.f32.xlu0 %v914
    %v916 = vpop.xlane.xlu0 %915
    %v917 = vadd.f32 %v898, %v899
    %918 = vadd.xlane.f32.xlu0 %v917
    %v919 = vpop.xlane.xlu0 %918
    %v920 = vadd.f32 %v900, %v901
    %921 = vadd.xlane.f32.xlu0 %v920
    %v922 = vpop.xlane.xlu0 %921
    %v923 = vadd.f32 %v902, %v903
    %924 = vadd.xlane.f32.xlu0 %v923
    %v925 = vpop.xlane.xlu0 %924
    %v926 = vadd.f32 %v904, %v905
    %927 = vadd.xlane.f32.xlu0 %v926
    %v928 = vpop.xlane.xlu0 %927
    %v929 = vadd.f32 %v906, %v907
    %930 = vadd.xlane.f32.xlu0 %v929
    %v931 = vpop.xlane.xlu0 %930
    %v932 = vld [vmem:[#allocation2] sm:$0x1]
    %v934 = vlaneseq
    %v935 = vshrl.u32 %v934, 7
    %v936 = vsub.s32 0, %v935
    %v937 = vrot.slane %v932, %v936
    %v939 = vadd.f32 %v910, %v937
    %v940 = vadd.f32 %v913, %v937
    %v941 = vadd.f32 %v916, %v937
    %v942 = vadd.f32 %v919, %v937
    %v943 = vadd.f32 %v922, %v937
    %v944 = vadd.f32 %v925, %v937
    %v945 = vadd.f32 %v928, %v937
    %v946 = vadd.f32 %v931, %v937
    %vm947 = vcmp.eq.s32.totalorder %v798, 8
    %949 = vset.pattern.permute.xlu0 0
    %950 = vperm.xlu0 %949, %v939
    %v951 = vpop.permute.xlu0 %950
    %954 = vset.pattern.permute.xlu0 0
    %955 = vperm.xlu0 %954, %v940
    %v956 = vpop.permute.xlu0 %955
    %959 = vset.pattern.permute.xlu0 0
    %960 = vperm.xlu0 %959, %v941
    %v961 = vpop.permute.xlu0 %960
    %964 = vset.pattern.permute.xlu0 0
    %965 = vperm.xlu0 %964, %v942
    %v966 = vpop.permute.xlu0 %965
    %969 = vset.pattern.permute.xlu0 0
    %970 = vperm.xlu0 %969, %v943
    %v971 = vpop.permute.xlu0 %970
    %974 = vset.pattern.permute.xlu0 0
    %975 = vperm.xlu0 %974, %v944
    %v976 = vpop.permute.xlu0 %975
    %979 = vset.pattern.permute.xlu0 0
    %980 = vperm.xlu0 %979, %v945
    %v981 = vpop.permute.xlu0 %980
    %984 = vset.pattern.permute.xlu0 0
    %985 = vperm.xlu0 %984, %v946
    %v986 = vpop.permute.xlu0 %985
    %v988 = vsel %vm947, %v951, %v865
    %v989 = vsel %vm947, %v956, %v867
    %v990 = vsel %vm947, %v961, %v869
    %v991 = vsel %vm947, %v966, %v871
    %v992 = vsel %vm947, %v971, %v873
    %v993 = vsel %vm947, %v976, %v875
    %v994 = vsel %vm947, %v981, %v877
    %v995 = vsel %vm947, %v986, %v879
    %996 = vst [vmem:[#allocation8] sm:$0xff] %v988
    %997 = vst [vmem:[#allocation8 + $0x8] sm:$0xff] %v989
    %998 = vst [vmem:[#allocation8 + $0x10] sm:$0xff] %v990
    %999 = vst [vmem:[#allocation8 + $0x18] sm:$0xff] %v991
    %1000 = vst [vmem:[#allocation8 + $0x20] sm:$0xff] %v992
    %1001 = vst [vmem:[#allocation8 + $0x28] sm:$0xff] %v993
    %1002 = vst [vmem:[#allocation8 + $0x30] sm:$0xff] %v994
    %1003 = vst [vmem:[#allocation8 + $0x38] sm:$0xff] %v995
    // Predicated region
    $region46: #{tpu_custom_call.1} parent=1 // pred_check
      _
    $region47: #{tpu_custom_call.1} parent=1 // pred_check_branch
      %1005 = sbr.rel (0) target = $region49
    $region48: #{tpu_custom_call.1} parent=1 // pred_region
      %s1007 = ssub.s32 1024, 1024
      %1008 = vsyncadd [#allocation5], %s1007
      %s1009 = sshll.u32 [#allocation8], 4
      %s1010 = int_to_ptr.vmem [resolvable:$true] %s1009
      %1015 = dma.vmem_to_hbm [thread:$0]  %s1010, 1024, %s9, [#allocation5], 128, 128, 8
    $region49: #{tpu_custom_call.1} parent=1 // pred_fallthru
      _
    // Predicated region
    $region50: #{tpu_custom_call.1} parent=1 // pred_check
      _
    $region51: #{tpu_custom_call.1} parent=1 // pred_check_branch
      %1017 = sbr.rel (0) target = $region53
    $region52: #{tpu_custom_call.1} parent=1 // pred_region
      %1018 = dma.done [#allocation5], 1024
    $region53: #{tpu_custom_call.1} parent=1 // pred_fallthru
      _
    %1019 = vsyncpa [#allocation4], 1
    %1020 = vsyncpa [#allocation7], 1
    %1021 = vsyncpa [#allocation5], 1

</llo_original>
